<compile_context>
chip_gen: v7x
topology: tpu7x:2x2x1
jax: 0.10.0
libtpu: 0.0.40
codegen_flags: <defaults>
</compile_context>

<pallas_src>
import numpy as np
import jax
import jax.numpy as jnp
from jax.experimental import pallas as pl
from jax.experimental.pallas import tpu as pltpu

# ---- static configuration --------------------------------------------------
N_GROUPS = 2        # n
K_CROPS  = 4        # k crops per group
C_IN     = 4
C_OUT    = 8        # layer = Conv2d(C_IN, C_OUT, 1, bias=False)
HF = WF  = 8        # feature spatial size (after layer)
RES      = (16, 16) # self.res (averaging canvas)
WIN_HW   = (7, 7)   # self.win spatial size


# ---- interpolation matrices (compile-time numpy constants) ------------------
def _bilinear_matrix(out_size, in_size):
    """Row-interpolation matrix matching F.interpolate(bilinear, align_corners=True)."""
    m = np.zeros((out_size, in_size), np.float32)
    if out_size == 1:
        m[0, 0] = 1.0
        return m
    scale = (in_size - 1) / (out_size - 1)
    for j in range(out_size):
        s = j * scale
        i0 = min(int(np.floor(s)), in_size - 1)
        i1 = min(i0 + 1, in_size - 1)
        frac = s - i0
        m[j, i0] += 1.0 - frac
        m[j, i1] += frac
    return m


# ---- fused kernel -----------------------------------------------------------
def _equinorm_kernel(x_ref, w_ref, kt_ref, kbt_ref, winr_ref, invaw_ref,
                     ft_ref, sfa2_ref, sse_ref):
    # x_ref : (1, k, C_IN, P)   group's input crops, pixels on the lane axis
    # w_ref : (C_OUT, C_IN)     1x1 conv weight
    # kt_ref: (P, Q)            kron(ry, rx).T   feature -> canvas resize
    # kbt_ref:(Q, P)            kron(by, bx).T   canvas  -> feature resize
    # winr_ref/invaw_ref: (1,Q) resized window / 1 / max(a_w, 1e-6)
    x = x_ref[...]
    w = w_ref[...]
    xs = x[0, 0]                       # first crop (weight 1)     (C_IN, P)
    xm = x[0, 1]                       # sum of crops 1..k-1 (same window weight)
    for i in range(2, x.shape[1]):
        xm = xm + x[0, i]

    # 1x1 conv (bias=False): channel contraction, pixels stay lane-dense.
    fs = jnp.dot(w, xs, preferred_element_type=jnp.float32)            # (C_OUT, P)
    fm = jnp.dot(w, xm, preferred_element_type=jnp.float32)            # (C_OUT, P)

    # bilinear resize feature -> canvas as one dense matmul each.
    kt = kt_ref[...]
    r0 = jnp.dot(fs, kt, preferred_element_type=jnp.float32)           # (C_OUT, Q)
    rm = jnp.dot(fm, kt, preferred_element_type=jnp.float32)           # (C_OUT, Q)

    # window-weighted average: crop 0 weight 1, crops 1..k-1 weight winr.
    fa = (r0 + rm * winr_ref[...]) * invaw_ref[...]                    # (C_OUT, Q)

    # resize canvas -> feature size (forward_mode==1 output and loss target).
    ft = jnp.dot(fa, kbt_ref[...], preferred_element_type=jnp.float32) # (C_OUT, P)
    ft_ref[0] = ft.astype(ft_ref.dtype)

    # per-group loss partial sums (global norm combined in the wrapper).
    d = fs - ft
    sfa2_ref[...] = jnp.reshape(jnp.sum(fa * fa), (1, 1, 1))
    sse_ref[...] = jnp.reshape(jnp.sum(d * d), (1, 1, 1))


# ---- wrapper ----------------------------------------------------------------
def equinorm_forward(f_in, layer_weight, win):
    """Returns (f_out, loss) — f_out is the module's return value; loss is self.loss."""
    n, k = N_GROUPS, K_CROPS
    nk, cin, hf, wf = f_in.shape
    cout = layer_weight.shape[0]
    ho, wo = RES
    P, Q = hf * wf, ho * wo

    # compile-time Kronecker interpolation matrices
    ry = _bilinear_matrix(ho, hf); rx = _bilinear_matrix(wo, wf)
    by = _bilinear_matrix(hf, ho); bx = _bilinear_matrix(wf, wo)
    kt = jnp.asarray(np.kron(ry, rx).T)      # (P, Q)  feature -> canvas
    kbt = jnp.asarray(np.kron(by, bx).T)     # (Q, P)  canvas  -> feature
    rwy = jnp.asarray(_bilinear_matrix(ho, win.shape[0]))
    rwx = jnp.asarray(_bilinear_matrix(wo, win.shape[1]))

    # group-invariant window on the canvas + normalization weight (computed once)
    winr = (rwy @ win.astype(jnp.float32) @ rwx.T).reshape(1, Q)
    invaw = 1.0 / jnp.maximum(1.0 + float(k - 1) * winr, 1e-6)

    x = f_in.reshape(n, k, cin, P)           # contiguous reshape, no transpose

    ft, sfa2, sse = pl.pallas_call(
        _equinorm_kernel,
        out_shape=(jax.ShapeDtypeStruct((n, cout, P), jnp.float32),
                   jax.ShapeDtypeStruct((n, 1, 1), jnp.float32),
                   jax.ShapeDtypeStruct((n, 1, 1), jnp.float32)),
        grid=(n,),
        in_specs=[pl.BlockSpec((1, k, cin, P), lambda b: (b, 0, 0, 0)),
                  pl.BlockSpec((cout, cin), lambda b: (0, 0)),
                  pl.BlockSpec((P, Q), lambda b: (0, 0)),
                  pl.BlockSpec((Q, P), lambda b: (0, 0)),
                  pl.BlockSpec((1, Q), lambda b: (0, 0)),
                  pl.BlockSpec((1, Q), lambda b: (0, 0))],
        out_specs=(pl.BlockSpec((1, cout, P), lambda b: (b, 0, 0)),
                   pl.BlockSpec((1, 1, 1), lambda b: (b, 0, 0)),
                   pl.BlockSpec((1, 1, 1), lambda b: (b, 0, 0))),
        compiler_params=pltpu.CompilerParams(
            dimension_semantics=("parallel",),       # v7x: shard groups over 2 TCs
            vmem_limit_bytes=32 * 1024 * 1024),      # explicit, safe on v5e/v6e/v7x
    )(x, layer_weight, kt, kbt, winr, invaw)

    # trivial scalar combine (global norm across groups)
    norm = jnp.sum(sfa2) / float(n * cout * Q)       # mean(fa ** 2)
    loss = (sse[:, 0, 0] / float(cout * P)) / norm   # per-group MSE / norm
    f_out = ft.reshape(n, cout, hf, wf)
    return f_out, loss


# ---- pure-JAX reference (same interpolation semantics) for a sanity check ---
def _ref_forward(f_in, w, win):
    n, k = N_GROUPS, K_CROPS
    f = jnp.einsum('nchw,oc->nohw', f_in, w)
    hf, wf = f.shape[-2:]
    ho, wo = RES
    ry = jnp.asarray(_bilinear_matrix(ho, hf)); rx = jnp.asarray(_bilinear_matrix(wo, wf))
    rwy = jnp.asarray(_bilinear_matrix(ho, win.shape[0]))
    rwx = jnp.asarray(_bilinear_matrix(wo, win.shape[1]))
    resized = jnp.einsum('yh,nchw,xw->ncyx', ry, f, rx).reshape(n, k, -1, ho, wo)
    winr = rwy @ win @ rwx.T
    a_img = resized[:, 0] + jnp.sum(resized[:, 1:] * winr[None, None, None], axis=1)
    a_w = 1.0 + (k - 1) * winr
    fa = a_img / jnp.maximum(a_w, 1e-6)
    by = jnp.asarray(_bilinear_matrix(hf, ho)); bx = jnp.asarray(_bilinear_matrix(wf, wo))
    ft = jnp.einsum('yh,nchw,xw->ncyx', by, fa, bx)
    fs = f[: n * k : k]
    loss = jnp.mean((fs - ft) ** 2, axis=(1, 2, 3)) / jnp.mean(fa ** 2)
    return ft, loss


if __name__ == "__main__":
    key = jax.random.PRNGKey(0)
    k1, k2 = jax.random.split(key)
    # input features: (n*k, C_IN, HF, WF)
    f_in = jax.random.normal(k1, (N_GROUPS * K_CROPS, C_IN, HF, WF), jnp.float32)
    # layer weight: Conv2d(C_IN, C_OUT, 1, bias=False) -> (C_OUT, C_IN)
    layer_weight = 0.1 * jax.random.normal(k2, (C_OUT, C_IN), jnp.float32)
    # self.win (the spatial window used for weighted averaging), deterministic Hann-like
    hw = 0.5 - 0.5 * np.cos(2.0 * np.pi * np.arange(WIN_HW[0]) / (WIN_HW[0] - 1))
    win = jnp.asarray(np.outer(hw, hw) + 0.05, jnp.float32)

    out, loss = jax.jit(equinorm_forward)(f_in, layer_weight, win)
    jax.block_until_ready((out, loss))

    ref_out, ref_loss = _ref_forward(f_in, layer_weight, win)
    assert np.allclose(np.asarray(out), np.asarray(ref_out), atol=1e-3, rtol=1e-3)
    assert np.allclose(np.asarray(loss), np.asarray(ref_loss), atol=1e-3, rtol=1e-3)
    print("KERNEL_OK")
</pallas_src>

<mosaic_0001>
module attributes {stable_mosaic.version = 11 : i64} {
  func.func @_equinorm_kernel(%arg0: i32, %arg1: memref<1x4x4x64xf32, #tpu.memory_space<vmem>>, %arg2: memref<8x4xf32, #tpu.memory_space<vmem>>, %arg3: memref<64x256xf32, #tpu.memory_space<vmem>>, %arg4: memref<256x64xf32, #tpu.memory_space<vmem>>, %arg5: memref<1x256xf32, #tpu.memory_space<vmem>>, %arg6: memref<1x256xf32, #tpu.memory_space<vmem>>, %arg7: memref<1x8x64xf32, #tpu.memory_space<vmem>>, %arg8: memref<1x1x1xf32, #tpu.memory_space<vmem>>, %arg9: memref<1x1x1xf32, #tpu.memory_space<vmem>>) attributes {dimension_semantics = [#tpu.dimension_semantics<parallel>], iteration_bounds = array<i64: 2>, scalar_prefetch = 0 : i64, scratch_operands = 0 : i64, tpu.core_type = #tpu.core_type<tc>, window_params = [{transform_indices = @transform_0, window_bounds = array<i64: 1, 4, 4, 64>}, {pipeline_mode = #tpu.pipeline_mode<synchronous>, transform_indices = @transform_1, window_bounds = array<i64: 8, 4>}, {pipeline_mode = #tpu.pipeline_mode<synchronous>, transform_indices = @transform_2, window_bounds = array<i64: 64, 256>}, {pipeline_mode = #tpu.pipeline_mode<synchronous>, transform_indices = @transform_3, window_bounds = array<i64: 256, 64>}, {pipeline_mode = #tpu.pipeline_mode<synchronous>, transform_indices = @transform_4, window_bounds = array<i64: 1, 256>}, {pipeline_mode = #tpu.pipeline_mode<synchronous>, transform_indices = @transform_5, window_bounds = array<i64: 1, 256>}, {transform_indices = @transform_6, window_bounds = array<i64: 1, 8, 64>}, {transform_indices = @transform_7, window_bounds = array<i64: 1, 1, 1>}, {transform_indices = @transform_8, window_bounds = array<i64: 1, 1, 1>}]} {
    %c0 = arith.constant 0 : index
    %c0_0 = arith.constant 0 : index
    %c0_1 = arith.constant 0 : index
    %c0_2 = arith.constant 0 : index
    %0 = vector.load %arg1[%c0, %c0_0, %c0_1, %c0_2] : memref<1x4x4x64xf32, #tpu.memory_space<vmem>>, vector<1x4x4x64xf32>
    %c0_3 = arith.constant 0 : index
    %c0_4 = arith.constant 0 : index
    %1 = vector.load %arg2[%c0_3, %c0_4] : memref<8x4xf32, #tpu.memory_space<vmem>>, vector<8x4xf32>
    %2 = vector.extract_strided_slice %0 {offsets = [0, 0, 0, 0], sizes = [1, 1, 4, 64], strides = [1, 1, 1, 1]} : vector<1x4x4x64xf32> to vector<1x1x4x64xf32>
    %3 = vector.shape_cast %2 : vector<1x1x4x64xf32> to vector<4x64xf32>
    %4 = vector.extract_strided_slice %0 {offsets = [0, 1, 0, 0], sizes = [1, 1, 4, 64], strides = [1, 1, 1, 1]} : vector<1x4x4x64xf32> to vector<1x1x4x64xf32>
    %5 = vector.shape_cast %4 : vector<1x1x4x64xf32> to vector<4x64xf32>
    %6 = vector.extract_strided_slice %0 {offsets = [0, 2, 0, 0], sizes = [1, 1, 4, 64], strides = [1, 1, 1, 1]} : vector<1x4x4x64xf32> to vector<1x1x4x64xf32>
    %7 = vector.shape_cast %6 : vector<1x1x4x64xf32> to vector<4x64xf32>
    %8 = arith.addf %5, %7 : vector<4x64xf32>
    %9 = vector.extract_strided_slice %0 {offsets = [0, 3, 0, 0], sizes = [1, 1, 4, 64], strides = [1, 1, 1, 1]} : vector<1x4x4x64xf32> to vector<1x1x4x64xf32>
    %10 = vector.shape_cast %9 : vector<1x1x4x64xf32> to vector<4x64xf32>
    %11 = arith.addf %8, %10 : vector<4x64xf32>
    %cst = arith.constant dense<0.000000e+00> : vector<8x64xf32>
    %12 = tpu.matmul %1, %3, %cst {dimension_numbers = #tpu.dot_dimension_numbers<[1], [0], [0], [1], [0, 0, 1, 1], [], []>} : vector<8x4xf32>, vector<4x64xf32>, vector<8x64xf32> -> vector<8x64xf32>
    %cst_5 = arith.constant dense<0.000000e+00> : vector<8x64xf32>
    %13 = tpu.matmul %1, %11, %cst_5 {dimension_numbers = #tpu.dot_dimension_numbers<[1], [0], [0], [1], [0, 0, 1, 1], [], []>} : vector<8x4xf32>, vector<4x64xf32>, vector<8x64xf32> -> vector<8x64xf32>
    %c0_6 = arith.constant 0 : index
    %c0_7 = arith.constant 0 : index
    %14 = vector.load %arg3[%c0_6, %c0_7] : memref<64x256xf32, #tpu.memory_space<vmem>>, vector<64x256xf32>
    %cst_8 = arith.constant dense<0.000000e+00> : vector<8x256xf32>
    %15 = tpu.matmul %12, %14, %cst_8 {dimension_numbers = #tpu.dot_dimension_numbers<[1], [0], [0], [1], [0, 0, 1, 1], [], []>} : vector<8x64xf32>, vector<64x256xf32>, vector<8x256xf32> -> vector<8x256xf32>
    %cst_9 = arith.constant dense<0.000000e+00> : vector<8x256xf32>
    %16 = tpu.matmul %13, %14, %cst_9 {dimension_numbers = #tpu.dot_dimension_numbers<[1], [0], [0], [1], [0, 0, 1, 1], [], []>} : vector<8x64xf32>, vector<64x256xf32>, vector<8x256xf32> -> vector<8x256xf32>
    %c0_10 = arith.constant 0 : index
    %c0_11 = arith.constant 0 : index
    %17 = vector.load %arg5[%c0_10, %c0_11] : memref<1x256xf32, #tpu.memory_space<vmem>>, vector<1x256xf32>
    %18 = vector.broadcast %17 : vector<1x256xf32> to vector<8x256xf32>
    %19 = arith.mulf %16, %18 : vector<8x256xf32>
    %20 = arith.addf %15, %19 : vector<8x256xf32>
    %c0_12 = arith.constant 0 : index
    %c0_13 = arith.constant 0 : index
    %21 = vector.load %arg6[%c0_12, %c0_13] : memref<1x256xf32, #tpu.memory_space<vmem>>, vector<1x256xf32>
    %22 = vector.broadcast %21 : vector<1x256xf32> to vector<8x256xf32>
    %23 = arith.mulf %20, %22 : vector<8x256xf32>
    %c0_14 = arith.constant 0 : index
    %c0_15 = arith.constant 0 : index
    %24 = vector.load %arg4[%c0_14, %c0_15] : memref<256x64xf32, #tpu.memory_space<vmem>>, vector<256x64xf32>
    %cst_16 = arith.constant dense<0.000000e+00> : vector<8x64xf32>
    %25 = tpu.matmul %23, %24, %cst_16 {dimension_numbers = #tpu.dot_dimension_numbers<[1], [0], [0], [1], [0, 0, 1, 1], [], []>} : vector<8x256xf32>, vector<256x64xf32>, vector<8x64xf32> -> vector<8x64xf32>
    %c0_17 = arith.constant 0 : index
    %c0_18 = arith.constant 0 : index
    %c0_19 = arith.constant 0 : index
    %26 = vector.load %arg7[%c0_17, %c0_18, %c0_19] : memref<1x8x64xf32, #tpu.memory_space<vmem>>, vector<1x8x64xf32>
    %27 = vector.shape_cast %26 : vector<1x8x64xf32> to vector<8x64xf32>
    %28 = vector.shape_cast %25 : vector<8x64xf32> to vector<1x8x64xf32>
    tpu.vector_store %arg7[%c0_17, %c0_18, %c0_19], %28 {strides = array<i32>} : memref<1x8x64xf32, #tpu.memory_space<vmem>>, vector<1x8x64xf32>,
    %29 = arith.subf %12, %25 : vector<8x64xf32>
    %30 = arith.mulf %23, %23 : vector<8x256xf32>
    %31 = vector.shape_cast %30 : vector<8x256xf32> to vector<1x8x256xf32>
    %cst_20 = arith.constant dense<0.000000e+00> : vector<1xf32>
    %32 = vector.multi_reduction <add>, %31, %cst_20 [1, 2] : vector<1x8x256xf32> to vector<1xf32>
    %33 = vector.shape_cast %32 : vector<1xf32> to vector<1x1x1xf32>
    %34 = vector.extract %33[0, 0, 0] : f32 from vector<1x1x1xf32>
    %35 = vector.broadcast %34 : f32 to vector<1x1x1xf32>
    %c0_21 = arith.constant 0 : index
    %c0_22 = arith.constant 0 : index
    %c0_23 = arith.constant 0 : index
    %36 = vector.load %arg8[%c0_21, %c0_22, %c0_23] : memref<1x1x1xf32, #tpu.memory_space<vmem>>, vector<1x1x1xf32>
    tpu.vector_store %arg8[%c0_21, %c0_22, %c0_23], %35 {strides = array<i32>} : memref<1x1x1xf32, #tpu.memory_space<vmem>>, vector<1x1x1xf32>,
    %37 = arith.mulf %29, %29 : vector<8x64xf32>
    %38 = vector.shape_cast %37 : vector<8x64xf32> to vector<1x8x64xf32>
    %cst_24 = arith.constant dense<0.000000e+00> : vector<1xf32>
    %39 = vector.multi_reduction <add>, %38, %cst_24 [1, 2] : vector<1x8x64xf32> to vector<1xf32>
    %40 = vector.shape_cast %39 : vector<1xf32> to vector<1x1x1xf32>
    %41 = vector.extract %40[0, 0, 0] : f32 from vector<1x1x1xf32>
    %42 = vector.broadcast %41 : f32 to vector<1x1x1xf32>
    %c0_25 = arith.constant 0 : index
    %c0_26 = arith.constant 0 : index
    %c0_27 = arith.constant 0 : index
    %43 = vector.load %arg9[%c0_25, %c0_26, %c0_27] : memref<1x1x1xf32, #tpu.memory_space<vmem>>, vector<1x1x1xf32>
    tpu.vector_store %arg9[%c0_25, %c0_26, %c0_27], %42 {strides = array<i32>} : memref<1x1x1xf32, #tpu.memory_space<vmem>>, vector<1x1x1xf32>,
    return
  }
  func.func @transform_0(%arg0: i32) -> (i32, i32, i32, i32) {
    %c0_i32 = arith.constant 0 : i32
    %c0_i32_0 = arith.constant 0 : i32
    %c0_i32_1 = arith.constant 0 : i32
    %c0_i32_2 = arith.constant 0 : i32
    return %arg0, %c0_i32, %c0_i32_0, %c0_i32_1 : i32, i32, i32, i32
  }
  func.func @transform_1(%arg0: i32) -> (i32, i32) {
    %c0_i32 = arith.constant 0 : i32
    %c0_i32_0 = arith.constant 0 : i32
    %c0_i32_1 = arith.constant 0 : i32
    return %c0_i32, %c0_i32_0 : i32, i32
  }
  func.func @transform_2(%arg0: i32) -> (i32, i32) {
    %c0_i32 = arith.constant 0 : i32
    %c0_i32_0 = arith.constant 0 : i32
    %c0_i32_1 = arith.constant 0 : i32
    return %c0_i32, %c0_i32_0 : i32, i32
  }
  func.func @transform_3(%arg0: i32) -> (i32, i32) {
    %c0_i32 = arith.constant 0 : i32
    %c0_i32_0 = arith.constant 0 : i32
    %c0_i32_1 = arith.constant 0 : i32
    return %c0_i32, %c0_i32_0 : i32, i32
  }
  func.func @transform_4(%arg0: i32) -> (i32, i32) {
    %c0_i32 = arith.constant 0 : i32
    %c0_i32_0 = arith.constant 0 : i32
    %c0_i32_1 = arith.constant 0 : i32
    return %c0_i32, %c0_i32_0 : i32, i32
  }
  func.func @transform_5(%arg0: i32) -> (i32, i32) {
    %c0_i32 = arith.constant 0 : i32
    %c0_i32_0 = arith.constant 0 : i32
    %c0_i32_1 = arith.constant 0 : i32
    return %c0_i32, %c0_i32_0 : i32, i32
  }
  func.func @transform_6(%arg0: i32) -> (i32, i32, i32) {
    %c0_i32 = arith.constant 0 : i32
    %c0_i32_0 = arith.constant 0 : i32
    %c0_i32_1 = arith.constant 0 : i32
    return %arg0, %c0_i32, %c0_i32_0 : i32, i32, i32
  }
  func.func @transform_7(%arg0: i32) -> (i32, i32, i32) {
    %c0_i32 = arith.constant 0 : i32
    %c0_i32_0 = arith.constant 0 : i32
    %c0_i32_1 = arith.constant 0 : i32
    return %arg0, %c0_i32, %c0_i32_0 : i32, i32, i32
  }
  func.func @transform_8(%arg0: i32) -> (i32, i32, i32) {
    %c0_i32 = arith.constant 0 : i32
    %c0_i32_0 = arith.constant 0 : i32
    %c0_i32_1 = arith.constant 0 : i32
    return %arg0, %c0_i32, %c0_i32_0 : i32, i32, i32
  }
}

</mosaic_0001>

<llo_original>
// kernel: equinorm_forward.1
$region0: #{equinorm_forward.1}
  #allocation0 [shape = 'u32[]', space=smem, size = 0x4, offset = 0x4, fixed_abs, tag = 'smem constant byte address 0x4 - core index']
  #allocation1 [shape = 'u32[144,128]{1,0:T(1,128)}', space=vmem, size = 0x12000, scoped, tag = 'internal scratch']
  %s0 = inlined_call_operand.vmem [shape: f32[2,4,4,64], index: 0, kind: input, shape index: {}]
  %s1 = inlined_call_operand.vmem [shape: f32[8,4], index: 1, kind: input, shape index: {}]
  %s2 = inlined_call_operand.hbm [shape: f32[64,256], index: 2, kind: input, shape index: {}]
  %s3 = inlined_call_operand.vmem [shape: f32[256,64], index: 3, kind: input, shape index: {}]
  %s4 = inlined_call_operand.vmem [shape: f32[1,256], index: 4, kind: input, shape index: {}]
  %s5 = inlined_call_operand.vmem [shape: f32[1,256], index: 5, kind: input, shape index: {}]
  %s6 = inlined_call_operand.vmem [shape: f32[2,8,64], index: 6, kind: output, shape index: {0}]
  %s7 = inlined_call_operand.vmem [shape: f32[2,1,1], index: 7, kind: output, shape index: {1}]
  %s8 = inlined_call_operand.vmem [shape: f32[2,1,1], index: 8, kind: output, shape index: {2}]
  %9 = xla_tuple %s6, %s7, %s8
  %s10 = sld [smem:[#allocation0]]
  $region77: #{equinorm_forward.1} parent=0
    _
  %s12 = ssub.s32 1, %s10
  %s13 = scalar_select 0, %s12, %s10
  $region1: #{equinorm_forward.1} parent=0
    #allocation2 [shape = 'u8[65536]{0}', space=vmem, size = 0x10000, scoped, tag = 'input window, operand 2, single buffered']
    #allocation3 [shape = 's32[2]{0}', space=sflag, size = 0x8, scoped, tag = 'scoped memory for equinorm_forward.1']
    %14 = vsyncpa [#allocation3], 0
    loop: start=0, step=1, limit=4
    $region2: #{equinorm_forward.1} parent=1 // loop_pre_header
      _
    $region3: #{equinorm_forward.1} parent=1 // loop_header
      %s16 = sphi 0, %s20
      %p17 = scmp.ge.s32.totalorder %s16, 4
      %s26 = sphi 0, %s28
      %s29 = sphi 0, %s26
      %s30 = sphi 0, %s29
      %s46 = sphi 0, %s30
      %s50 = sphi 0, %s50
      %s52 = sphi 0, %s50
      %s53 = sphi 0, %s52
      %s67 = sphi 0, %s53
      %s71 = sphi 0, %s71
      %s73 = sphi 0, %s71
      %s74 = sphi 0, %s73
      %s88 = sphi 0, %s74
      %s92 = sphi 0, %s92
      %s94 = sphi 0, %s92
      %s95 = sphi 0, %s94
      %s109 = sphi 0, %s95
      %s113 = sphi 0, %s113
      %s115 = sphi 0, %s113
      %s116 = sphi 0, %s115
      %s130 = sphi 0, %s116
      %s134 = sphi 0, %s134
      %s136 = sphi 0, %s134
      %s137 = sphi 0, %s136
      %s151 = sphi 0, %s137
      %s157 = sphi 0, %s159
      %s160 = sphi 0, %s157
      %s161 = sphi 0, %s160
      %s177 = sphi 0, %s161
      %s183 = sphi 0, %s185
      %s186 = sphi 0, %s183
      %s187 = sphi 0, %s186
      %s203 = sphi 0, %s187
      %s209 = sphi 0, %s211
      %s212 = sphi 0, %s209
      %s213 = sphi 0, %s212
      %s229 = sphi 0, %s213
    $region4: #{equinorm_forward.1} parent=1 // loop_header_branch
      %19 = sbr.rel (%p17) target = $region8
    $region5: #{equinorm_forward.1} parent=1 // loop_body
      %s21 = ssub.s32 %s16, 1
      %s22 = ssub.s32 %s16, 2
      %s23 = sadd.s32 %s16, 1
      %s24 = ssub.s32 %s16, %s23
      %p25 = scmp.eq.s32.totalorder %s24, 0
      %s27 = sadd.s32 %s26, 1
      %s28 = scalar_select %p25, %s26, %s27
      %p31 = pneg %p25
      %p32 = scmp.eq.s32.totalorder %s16, 1
      %p33 = por %p31, %p32
      %p34 = scmp.ne.s32.totalorder %s26, %s29
      %p35 = scmp.eq.s32.totalorder %s16, 0
      %p36 = por %p34, %p35
      %p37 = scmp.ne.s32.totalorder %s26, %s29
      %p38 = scmp.eq.s32.totalorder %s21, 1
      %p39 = por %p37, %p38
      %p40 = scmp.ne.s32.totalorder %s29, %s30
      %p41 = scmp.eq.s32.totalorder %s21, 0
      %p42 = por %p40, %p41
      %p43 = scmp.ne.s32.totalorder %s29, %s30
      %p44 = scmp.eq.s32.totalorder %s22, 1
      %p45 = por %p43, %p44
      %p47 = scmp.ne.s32.totalorder %s30, %s46
      %p48 = scmp.eq.s32.totalorder %s22, 0
      %p49 = por %p47, %p48
      %s51 = sadd.s32 %s50, 1
      %p54 = scmp.eq.s32.totalorder %s16, 1
      %p55 = scmp.ne.s32.totalorder %s50, %s52
      %p56 = scmp.eq.s32.totalorder %s16, 0
      %p57 = por %p55, %p56
      %p58 = scmp.ne.s32.totalorder %s50, %s52
      %p59 = scmp.eq.s32.totalorder %s21, 1
      %p60 = por %p58, %p59
      %p61 = scmp.ne.s32.totalorder %s52, %s53
      %p62 = scmp.eq.s32.totalorder %s21, 0
      %p63 = por %p61, %p62
      %p64 = scmp.ne.s32.totalorder %s52, %s53
      %p65 = scmp.eq.s32.totalorder %s22, 1
      %p66 = por %p64, %p65
      %p68 = scmp.ne.s32.totalorder %s53, %s67
      %p69 = scmp.eq.s32.totalorder %s22, 0
      %p70 = por %p68, %p69
      %s72 = sadd.s32 %s71, 1
      %p75 = scmp.eq.s32.totalorder %s16, 1
      %p76 = scmp.ne.s32.totalorder %s71, %s73
      %p77 = scmp.eq.s32.totalorder %s16, 0
      %p78 = por %p76, %p77
      %p79 = scmp.ne.s32.totalorder %s71, %s73
      %p80 = scmp.eq.s32.totalorder %s21, 1
      %p81 = por %p79, %p80
      %p82 = scmp.ne.s32.totalorder %s73, %s74
      %p83 = scmp.eq.s32.totalorder %s21, 0
      %p84 = por %p82, %p83
      %p85 = scmp.ne.s32.totalorder %s73, %s74
      %p86 = scmp.eq.s32.totalorder %s22, 1
      %p87 = por %p85, %p86
      %p89 = scmp.ne.s32.totalorder %s74, %s88
      %p90 = scmp.eq.s32.totalorder %s22, 0
      %p91 = por %p89, %p90
      %s93 = sadd.s32 %s92, 1
      %p96 = scmp.eq.s32.totalorder %s16, 1
      %p97 = scmp.ne.s32.totalorder %s92, %s94
      %p98 = scmp.eq.s32.totalorder %s16, 0
      %p99 = por %p97, %p98
      %p100 = scmp.ne.s32.totalorder %s92, %s94
      %p101 = scmp.eq.s32.totalorder %s21, 1
      %p102 = por %p100, %p101
      %p103 = scmp.ne.s32.totalorder %s94, %s95
      %p104 = scmp.eq.s32.totalorder %s21, 0
      %p105 = por %p103, %p104
      %p106 = scmp.ne.s32.totalorder %s94, %s95
      %p107 = scmp.eq.s32.totalorder %s22, 1
      %p108 = por %p106, %p107
      %p110 = scmp.ne.s32.totalorder %s95, %s109
      %p111 = scmp.eq.s32.totalorder %s22, 0
      %p112 = por %p110, %p111
      %s114 = sadd.s32 %s113, 1
      %p117 = scmp.eq.s32.totalorder %s16, 1
      %p118 = scmp.ne.s32.totalorder %s113, %s115
      %p119 = scmp.eq.s32.totalorder %s16, 0
      %p120 = por %p118, %p119
      %p121 = scmp.ne.s32.totalorder %s113, %s115
      %p122 = scmp.eq.s32.totalorder %s21, 1
      %p123 = por %p121, %p122
      %p124 = scmp.ne.s32.totalorder %s115, %s116
      %p125 = scmp.eq.s32.totalorder %s21, 0
      %p126 = por %p124, %p125
      %p127 = scmp.ne.s32.totalorder %s115, %s116
      %p128 = scmp.eq.s32.totalorder %s22, 1
      %p129 = por %p127, %p128
      %p131 = scmp.ne.s32.totalorder %s116, %s130
      %p132 = scmp.eq.s32.totalorder %s22, 0
      %p133 = por %p131, %p132
      %s135 = sadd.s32 %s134, 1
      %p138 = scmp.eq.s32.totalorder %s16, 1
      %p139 = scmp.ne.s32.totalorder %s134, %s136
      %p140 = scmp.eq.s32.totalorder %s16, 0
      %p141 = por %p139, %p140
      %p142 = scmp.ne.s32.totalorder %s134, %s136
      %p143 = scmp.eq.s32.totalorder %s21, 1
      %p144 = por %p142, %p143
      %p145 = scmp.ne.s32.totalorder %s136, %s137
      %p146 = scmp.eq.s32.totalorder %s21, 0
      %p147 = por %p145, %p146
      %p148 = scmp.ne.s32.totalorder %s136, %s137
      %p149 = scmp.eq.s32.totalorder %s22, 1
      %p150 = por %p148, %p149
      %p152 = scmp.ne.s32.totalorder %s137, %s151
      %p153 = scmp.eq.s32.totalorder %s22, 0
      %p154 = por %p152, %p153
      %s155 = ssub.s32 %s16, %s23
      %p156 = scmp.eq.s32.totalorder %s155, 0
      %s158 = sadd.s32 %s157, 1
      %s159 = scalar_select %p156, %s157, %s158
      %p162 = pneg %p156
      %p163 = scmp.eq.s32.totalorder %s16, 1
      %p164 = por %p162, %p163
      %p165 = scmp.ne.s32.totalorder %s157, %s160
      %p166 = scmp.eq.s32.totalorder %s16, 0
      %p167 = por %p165, %p166
      %p168 = scmp.ne.s32.totalorder %s157, %s160
      %p169 = scmp.eq.s32.totalorder %s21, 1
      %p170 = por %p168, %p169
      %p171 = scmp.ne.s32.totalorder %s160, %s161
      %p172 = scmp.eq.s32.totalorder %s21, 0
      %p173 = por %p171, %p172
      %p174 = scmp.ne.s32.totalorder %s160, %s161
      %p175 = scmp.eq.s32.totalorder %s22, 1
      %p176 = por %p174, %p175
      %p178 = scmp.ne.s32.totalorder %s161, %s177
      %p179 = scmp.eq.s32.totalorder %s22, 0
      %p180 = por %p178, %p179
      %s181 = ssub.s32 %s16, %s23
      %p182 = scmp.eq.s32.totalorder %s181, 0
      %s184 = sadd.s32 %s183, 1
      %s185 = scalar_select %p182, %s183, %s184
      %p188 = pneg %p182
      %p189 = scmp.eq.s32.totalorder %s16, 1
      %p190 = por %p188, %p189
      %p191 = scmp.ne.s32.totalorder %s183, %s186
      %p192 = scmp.eq.s32.totalorder %s16, 0
      %p193 = por %p191, %p192
      %p194 = scmp.ne.s32.totalorder %s183, %s186
      %p195 = scmp.eq.s32.totalorder %s21, 1
      %p196 = por %p194, %p195
      %p197 = scmp.ne.s32.totalorder %s186, %s187
      %p198 = scmp.eq.s32.totalorder %s21, 0
      %p199 = por %p197, %p198
      %p200 = scmp.ne.s32.totalorder %s186, %s187
      %p201 = scmp.eq.s32.totalorder %s22, 1
      %p202 = por %p200, %p201
      %p204 = scmp.ne.s32.totalorder %s187, %s203
      %p205 = scmp.eq.s32.totalorder %s22, 0
      %p206 = por %p204, %p205
      %s207 = ssub.s32 %s16, %s23
      %p208 = scmp.eq.s32.totalorder %s207, 0
      %s210 = sadd.s32 %s209, 1
      %s211 = scalar_select %p208, %s209, %s210
      %p214 = pneg %p208
      %p215 = scmp.eq.s32.totalorder %s16, 1
      %p216 = por %p214, %p215
      %p217 = scmp.ne.s32.totalorder %s209, %s212
      %p218 = scmp.eq.s32.totalorder %s16, 0
      %p219 = por %p217, %p218
      %p220 = scmp.ne.s32.totalorder %s209, %s212
      %p221 = scmp.eq.s32.totalorder %s21, 1
      %p222 = por %p220, %p221
      %p223 = scmp.ne.s32.totalorder %s212, %s213
      %p224 = scmp.eq.s32.totalorder %s21, 0
      %p225 = por %p223, %p224
      %p226 = scmp.ne.s32.totalorder %s212, %s213
      %p227 = scmp.eq.s32.totalorder %s22, 1
      %p228 = por %p226, %p227
      %p230 = scmp.ne.s32.totalorder %s213, %s229
      %p231 = scmp.eq.s32.totalorder %s22, 0
      %p232 = por %p230, %p231
      %p233 = scmp.le.s32.totalorder 1, %s16
      %p234 = scmp.lt.s32.totalorder %s16, 3
      %p235 = pnand %p233, %p234
      %p236 = pneg %p235
      // Predicated region
      $region9: #{equinorm_forward.1} parent=5 // pred_check
        _
      $region10: #{equinorm_forward.1} parent=5 // pred_check_branch
        %238 = sbr.rel (%p235) target = $region12
      $region11: #{equinorm_forward.1} parent=5 // pred_region
        %s239 = ssub.s32 %s16, 1
        // Predicated region
        $region13: #{equinorm_forward.1} parent=11 // pred_check
          %p240 = pneg %p63
        $region14: #{equinorm_forward.1} parent=11 // pred_check_branch
          %242 = sbr.rel (%p240) target = $region16
        $region15: #{equinorm_forward.1} parent=11 // pred_region
          _
        $region16: #{equinorm_forward.1} parent=11 // pred_fallthru
          _
        // Predicated region
        $region17: #{equinorm_forward.1} parent=11 // pred_check
          %p243 = pneg %p84
        $region18: #{equinorm_forward.1} parent=11 // pred_check_branch
          %245 = sbr.rel (%p243) target = $region20
        $region19: #{equinorm_forward.1} parent=11 // pred_region
          %s247 = ssub.s32 2048, 2048
          %248 = vsyncadd [#allocation3], %s247
          %s249 = sshll.u32 [#allocation2], 4
          %s250 = int_to_ptr.vmem [resolvable:$true] %s249
          %255 = dma.hbm_to_vmem [thread:$0]  %s2, 2048, %s250, [#allocation3], 256, 256, 16
        $region20: #{equinorm_forward.1} parent=11 // pred_fallthru
          _
        // Predicated region
        $region21: #{equinorm_forward.1} parent=11 // pred_check
          %p256 = pneg %p105
        $region22: #{equinorm_forward.1} parent=11 // pred_check_branch
          %258 = sbr.rel (%p256) target = $region24
        $region23: #{equinorm_forward.1} parent=11 // pred_region
          _
        $region24: #{equinorm_forward.1} parent=11 // pred_fallthru
          _
        // Predicated region
        $region25: #{equinorm_forward.1} parent=11 // pred_check
          %p259 = pneg %p126
        $region26: #{equinorm_forward.1} parent=11 // pred_check_branch
          %261 = sbr.rel (%p259) target = $region28
        $region27: #{equinorm_forward.1} parent=11 // pred_region
          _
        $region28: #{equinorm_forward.1} parent=11 // pred_fallthru
          _
        // Predicated region
        $region29: #{equinorm_forward.1} parent=11 // pred_check
          %p262 = pneg %p147
        $region30: #{equinorm_forward.1} parent=11 // pred_check_branch
          %264 = sbr.rel (%p262) target = $region32
        $region31: #{equinorm_forward.1} parent=11 // pred_region
          _
        $region32: #{equinorm_forward.1} parent=11 // pred_fallthru
          _
      $region12: #{equinorm_forward.1} parent=5 // pred_fallthru
        _
      %p265 = scmp.lt.s32.totalorder %s16, 2
      // Predicated region
      $region33: #{equinorm_forward.1} parent=5 // pred_check
        %p266 = pneg %p265
      $region34: #{equinorm_forward.1} parent=5 // pred_check_branch
        %268 = sbr.rel (%p266) target = $region36
      $region35: #{equinorm_forward.1} parent=5 // pred_region
        // Predicated region
        $region37: #{equinorm_forward.1} parent=35 // pred_check
          %p269 = pneg %p36
        $region38: #{equinorm_forward.1} parent=35 // pred_check_branch
          %271 = sbr.rel (%p269) target = $region40
        $region39: #{equinorm_forward.1} parent=35 // pred_region
          %p272 = scmp.lt.s32.totalorder %s16, 1
          %s273 = scalar_select %p272, %s16, 1
          %s274 = smul.addr %s273, 4
          %s275 = smul.addr %s274, 4
          %s276 = scalar_lea.vmem %s0, %s275
        $region40: #{equinorm_forward.1} parent=35 // pred_fallthru
          _
      $region36: #{equinorm_forward.1} parent=5 // pred_fallthru
        _
      %p277 = scmp.le.s32.totalorder 1, %s16
      %p278 = scmp.lt.s32.totalorder %s16, 3
      %p279 = pnand %p277, %p278
      %p280 = pneg %p279
      // Predicated region
      $region41: #{equinorm_forward.1} parent=5 // pred_check
        _
      $region42: #{equinorm_forward.1} parent=5 // pred_check_branch
        %282 = sbr.rel (%p279) target = $region44
      $region43: #{equinorm_forward.1} parent=5 // pred_region
        %s283 = ssub.s32 %s16, 1
        // Predicated region
        $region45: #{equinorm_forward.1} parent=43 // pred_check
          %p284 = pneg %p84
        $region46: #{equinorm_forward.1} parent=43 // pred_check_branch
          %286 = sbr.rel (%p284) target = $region48
        $region47: #{equinorm_forward.1} parent=43 // pred_region
          %287 = dma.done [#allocation3], 2048
        $region48: #{equinorm_forward.1} parent=43 // pred_fallthru
          _
        %p288 = scmp.lt.s32.totalorder %s21, 1
        %s289 = scalar_select %p288, %s21, 1
        %s290 = smul.addr %s289, 4
        %s291 = smul.addr %s290, 4
        %s292 = scalar_lea.vmem %s0, %s291
        %p293 = pneg %p42
        %p294 = pneg %p39
        %p295 = pneg %p63
        %p296 = pneg %p60
        %p297 = pneg %p84
        %p298 = pneg %p81
        %p299 = pneg %p105
        %p300 = pneg %p102
        %p301 = pneg %p126
        %p302 = pneg %p123
        %p303 = pneg %p147
        %p304 = pneg %p144
        %p305 = pneg %p173
        %p306 = pneg %p170
        %p307 = scmp.lt.s32.totalorder %s21, 1
        %s308 = scalar_select %p307, %s21, 1
        %s309 = smul.addr %s308, 8
        %s310 = scalar_lea.vmem %s6, %s309
        %p311 = pneg %p199
        %p312 = pneg %p196
        %p313 = scmp.lt.s32.totalorder %s21, 1
        %s314 = scalar_select %p313, %s21, 1
        %s315 = scalar_lea.vmem %s7, %s314
        %p316 = pneg %p225
        %p317 = pneg %p222
        %p318 = scmp.lt.s32.totalorder %s21, 1
        %s319 = scalar_select %p318, %s21, 1
        %s320 = scalar_lea.vmem %s8, %s319
        %p321 = scmp.lt.s32.totalorder %s21, 1
        %s322 = scalar_select %p321, %s21, 1
        %s323 = smul.addr %s322, 4
        %s324 = smul.addr %s323, 4
        %s325 = scalar_lea.vmem %s0, %s324
        %p326 = scmp.lt.s32.totalorder %s21, 1
        %s327 = scalar_select %p326, %s21, 1
        %s328 = smul.addr %s327, 8
        %s329 = scalar_lea.vmem %s6, %s328
        %p330 = scmp.lt.s32.totalorder %s21, 1
        %s331 = scalar_select %p330, %s21, 1
        %s332 = scalar_lea.vmem %s7, %s331
        %p333 = scmp.lt.s32.totalorder %s21, 1
        %s334 = scalar_select %p333, %s21, 1
        %s335 = scalar_lea.vmem %s8, %s334
        %v336 = vld [vmem:[%s325] sm:$0xf]
        %v337 = vld [vmem:[%s325 + $0x4] sm:$0xf]
        %v338 = vld [vmem:[%s325 + $0x8] sm:$0xf]
        %v339 = vld [vmem:[%s325 + $0xc] sm:$0xf]
        %v340 = vld [vmem:[%s1] sm:$0xff]
        %v341 = vadd.f32 %v337, %v338
        %v342 = vadd.f32 %v341, %v339
        %vm343 = vcmask 31744
        %v345 = vsel %vm343, %v340, 0
        %vm347 = vcmask 1043456
        %v349 = vsel %vm347, %v336, 0
        %351 = vmatprep.subr.mxu0 0.0
        %352 = vmatpush1.msra.mxu0 %v349
        %353 = vmatprep.subr.mxu0 0.0
        %354 = vmatpush1.msra.mxu0 0.0
        %355 = vmatprep.subr.mxu0 0.0
        %356 = vmatpush1.msra.mxu0 0.0
        %357 = vmatprep.subr.mxu0 0.0
        %358 = vmatpush1.msra.mxu0 0.0
        %359 = vmatprep.subr.mxu0 0.0
        %360 = vmatpush1.msra.mxu0 0.0
        %361 = vmatprep.subr.mxu0 0.0
        %362 = vmatpush1.msra.mxu0 0.0
        %363 = vmatprep.subr.mxu0 0.0
        %364 = vmatpush1.msra.mxu0 0.0
        %365 = vmatprep.subr.mxu0 0.0
        %366 = vmatpush1.msra.mxu0 0.0
        %367 = vmatprep.subr.mxu0 0.0
        %368 = vmatpush1.msra.mxu0 0.0
        %369 = vmatprep.subr.mxu0 0.0
        %370 = vmatpush1.msra.mxu0 0.0
        %371 = vmatprep.subr.mxu0 0.0
        %372 = vmatpush1.msra.mxu0 0.0
        %373 = vmatprep.subr.mxu0 0.0
        %374 = vmatpush1.msra.mxu0 0.0
        %375 = vmatprep.subr.mxu0 0.0
        %376 = vmatpush1.msra.mxu0 0.0
        %377 = vmatprep.subr.mxu0 0.0
        %378 = vmatpush1.msra.mxu0 0.0
        %379 = vmatprep.subr.mxu0 0.0
        %380 = vmatpush1.msra.mxu0 0.0
        %381 = vmatprep.subr.mxu0 0.0
        %382 = vmatpush1.msra.mxu0 0.0
        %383 = vmatprep.subr.mxu0 0.0
        %384 = vmatpush1.msra.mxu0 0.0
        %385 = vmatprep.subr.mxu0 0.0
        %386 = vmatpush1.msra.mxu0 0.0
        %387 = vmatprep.subr.mxu0 0.0
        %388 = vmatpush1.msra.mxu0 0.0
        %389 = vmatprep.subr.mxu0 0.0
        %390 = vmatpush1.msra.mxu0 0.0
        %391 = vmatprep.subr.mxu0 0.0
        %392 = vmatpush1.msra.mxu0 0.0
        %393 = vmatprep.subr.mxu0 0.0
        %394 = vmatpush1.msra.mxu0 0.0
        %395 = vmatprep.subr.mxu0 0.0
        %396 = vmatpush1.msra.mxu0 0.0
        %397 = vmatprep.subr.mxu0 0.0
        %398 = vmatpush1.msra.mxu0 0.0
        %399 = vmatprep.subr.mxu0 0.0
        %400 = vmatpush1.msra.mxu0 0.0
        %401 = vmatprep.subr.mxu0 0.0
        %402 = vmatpush1.msra.mxu0 0.0
        %403 = vmatprep.subr.mxu0 0.0
        %404 = vmatpush1.msra.mxu0 0.0
        %405 = vmatprep.subr.mxu0 0.0
        %406 = vmatpush1.msra.mxu0 0.0
        %407 = vmatprep.subr.mxu0 0.0
        %408 = vmatpush1.msra.mxu0 0.0
        %409 = vmatprep.subr.mxu0 0.0
        %410 = vmatpush1.msra.mxu0 0.0
        %411 = vmatprep.subr.mxu0 0.0
        %412 = vmatpush1.msra.mxu0 0.0
        %413 = vmatprep.subr.mxu0 0.0
        %414 = vmatpush1.msra.mxu0 0.0
        %415 = vmatprep.mubr.f32.mxu0 0.0
        %416 = vmatmul.mubr.f32.gmra.mrb[0].mxu0 %v345
        %v417 = vpop.f32.mrb[0].mxu0
        %v418 = vadd.f32 0.0, %v417
        %v419 = vpop.f32.mrb[0].mxu0
        %420 = vdwg.mxu0
        %v422 = vsel %vm347, %v342, 0
        %424 = vmatprep.subr.mxu0 0.0
        %425 = vmatpush1.msra.mxu0 %v422
        %426 = vmatprep.subr.mxu0 0.0
        %427 = vmatpush1.msra.mxu0 0.0
        %428 = vmatprep.subr.mxu0 0.0
        %429 = vmatpush1.msra.mxu0 0.0
        %430 = vmatprep.subr.mxu0 0.0
        %431 = vmatpush1.msra.mxu0 0.0
        %432 = vmatprep.subr.mxu0 0.0
        %433 = vmatpush1.msra.mxu0 0.0
        %434 = vmatprep.subr.mxu0 0.0
        %435 = vmatpush1.msra.mxu0 0.0
        %436 = vmatprep.subr.mxu0 0.0
        %437 = vmatpush1.msra.mxu0 0.0
        %438 = vmatprep.subr.mxu0 0.0
        %439 = vmatpush1.msra.mxu0 0.0
        %440 = vmatprep.subr.mxu0 0.0
        %441 = vmatpush1.msra.mxu0 0.0
        %442 = vmatprep.subr.mxu0 0.0
        %443 = vmatpush1.msra.mxu0 0.0
        %444 = vmatprep.subr.mxu0 0.0
        %445 = vmatpush1.msra.mxu0 0.0
        %446 = vmatprep.subr.mxu0 0.0
        %447 = vmatpush1.msra.mxu0 0.0
        %448 = vmatprep.subr.mxu0 0.0
        %449 = vmatpush1.msra.mxu0 0.0
        %450 = vmatprep.subr.mxu0 0.0
        %451 = vmatpush1.msra.mxu0 0.0
        %452 = vmatprep.subr.mxu0 0.0
        %453 = vmatpush1.msra.mxu0 0.0
        %454 = vmatprep.subr.mxu0 0.0
        %455 = vmatpush1.msra.mxu0 0.0
        %456 = vmatprep.subr.mxu0 0.0
        %457 = vmatpush1.msra.mxu0 0.0
        %458 = vmatprep.subr.mxu0 0.0
        %459 = vmatpush1.msra.mxu0 0.0
        %460 = vmatprep.subr.mxu0 0.0
        %461 = vmatpush1.msra.mxu0 0.0
        %462 = vmatprep.subr.mxu0 0.0
        %463 = vmatpush1.msra.mxu0 0.0
        %464 = vmatprep.subr.mxu0 0.0
        %465 = vmatpush1.msra.mxu0 0.0
        %466 = vmatprep.subr.mxu0 0.0
        %467 = vmatpush1.msra.mxu0 0.0
        %468 = vmatprep.subr.mxu0 0.0
        %469 = vmatpush1.msra.mxu0 0.0
        %470 = vmatprep.subr.mxu0 0.0
        %471 = vmatpush1.msra.mxu0 0.0
        %472 = vmatprep.subr.mxu0 0.0
        %473 = vmatpush1.msra.mxu0 0.0
        %474 = vmatprep.subr.mxu0 0.0
        %475 = vmatpush1.msra.mxu0 0.0
        %476 = vmatprep.subr.mxu0 0.0
        %477 = vmatpush1.msra.mxu0 0.0
        %478 = vmatprep.subr.mxu0 0.0
        %479 = vmatpush1.msra.mxu0 0.0
        %480 = vmatprep.subr.mxu0 0.0
        %481 = vmatpush1.msra.mxu0 0.0
        %482 = vmatprep.subr.mxu0 0.0
        %483 = vmatpush1.msra.mxu0 0.0
        %484 = vmatprep.subr.mxu0 0.0
        %485 = vmatpush1.msra.mxu0 0.0
        %486 = vmatprep.subr.mxu0 0.0
        %487 = vmatpush1.msra.mxu0 0.0
        %488 = vmatprep.mubr.f32.mxu0 0.0
        %489 = vmatmul.mubr.f32.gmra.mrb[0].mxu0 %v345
        %v490 = vpop.f32.mrb[0].mxu0
        %v491 = vadd.f32 0.0, %v490
        %v492 = vpop.f32.mrb[0].mxu0
        %493 = vdwg.mxu0
        %v494 = vld [vmem:[#allocation2] sm:$0xff]
        %v495 = vld [vmem:[#allocation2 + $0x8] sm:$0xff]
        %v496 = vld [vmem:[#allocation2 + $0x10] sm:$0xff]
        %v497 = vld [vmem:[#allocation2 + $0x18] sm:$0xff]
        %v498 = vld [vmem:[#allocation2 + $0x20] sm:$0xff]
        %v499 = vld [vmem:[#allocation2 + $0x28] sm:$0xff]
        %v500 = vld [vmem:[#allocation2 + $0x30] sm:$0xff]
        %v501 = vld [vmem:[#allocation2 + $0x38] sm:$0xff]
        %v502 = vld [vmem:[#allocation2 + $0x40] sm:$0xff]
        %v503 = vld [vmem:[#allocation2 + $0x48] sm:$0xff]
        %v504 = vld [vmem:[#allocation2 + $0x50] sm:$0xff]
        %v505 = vld [vmem:[#allocation2 + $0x58] sm:$0xff]
        %v506 = vld [vmem:[#allocation2 + $0x60] sm:$0xff]
        %v507 = vld [vmem:[#allocation2 + $0x68] sm:$0xff]
        %v508 = vld [vmem:[#allocation2 + $0x70] sm:$0xff]
        %v509 = vld [vmem:[#allocation2 + $0x78] sm:$0xff]
        %vm510 = vcmask 523264
        %v512 = vsel %vm510, %v491, 0
        %514 = vmatprep.subr.mxu0 %v495
        %515 = vmatpush1.msra.mxu0 %v494
        %516 = vmatprep.subr.mxu0 %v497
        %517 = vmatpush1.msra.mxu0 %v496
        %518 = vmatprep.subr.mxu0 %v499
        %519 = vmatpush1.msra.mxu0 %v498
        %520 = vmatprep.subr.mxu0 %v501
        %521 = vmatpush1.msra.mxu0 %v500
        %522 = vmatprep.subr.mxu0 %v503
        %523 = vmatpush1.msra.mxu0 %v502
        %524 = vmatprep.subr.mxu0 %v505
        %525 = vmatpush1.msra.mxu0 %v504
        %526 = vmatprep.subr.mxu0 %v507
        %527 = vmatpush1.msra.mxu0 %v506
        %528 = vmatprep.subr.mxu0 %v509
        %529 = vmatpush1.msra.mxu0 %v508
        %530 = vmatprep.subr.mxu0 0.0
        %531 = vmatpush1.msra.mxu0 0.0
        %532 = vmatprep.subr.mxu0 0.0
        %533 = vmatpush1.msra.mxu0 0.0
        %534 = vmatprep.subr.mxu0 0.0
        %535 = vmatpush1.msra.mxu0 0.0
        %536 = vmatprep.subr.mxu0 0.0
        %537 = vmatpush1.msra.mxu0 0.0
        %538 = vmatprep.subr.mxu0 0.0
        %539 = vmatpush1.msra.mxu0 0.0
        %540 = vmatprep.subr.mxu0 0.0
        %541 = vmatpush1.msra.mxu0 0.0
        %542 = vmatprep.subr.mxu0 0.0
        %543 = vmatpush1.msra.mxu0 0.0
        %544 = vmatprep.subr.mxu0 0.0
        %545 = vmatpush1.msra.mxu0 0.0
        %546 = vmatprep.subr.mxu0 0.0
        %547 = vmatpush1.msra.mxu0 0.0
        %548 = vmatprep.subr.mxu0 0.0
        %549 = vmatpush1.msra.mxu0 0.0
        %550 = vmatprep.subr.mxu0 0.0
        %551 = vmatpush1.msra.mxu0 0.0
        %552 = vmatprep.subr.mxu0 0.0
        %553 = vmatpush1.msra.mxu0 0.0
        %554 = vmatprep.subr.mxu0 0.0
        %555 = vmatpush1.msra.mxu0 0.0
        %556 = vmatprep.subr.mxu0 0.0
        %557 = vmatpush1.msra.mxu0 0.0
        %558 = vmatprep.subr.mxu0 0.0
        %559 = vmatpush1.msra.mxu0 0.0
        %560 = vmatprep.subr.mxu0 0.0
        %561 = vmatpush1.msra.mxu0 0.0
        %562 = vmatprep.subr.mxu0 0.0
        %563 = vmatpush1.msra.mxu0 0.0
        %564 = vmatprep.subr.mxu0 0.0
        %565 = vmatpush1.msra.mxu0 0.0
        %566 = vmatprep.subr.mxu0 0.0
        %567 = vmatpush1.msra.mxu0 0.0
        %568 = vmatprep.subr.mxu0 0.0
        %569 = vmatpush1.msra.mxu0 0.0
        %570 = vmatprep.subr.mxu0 0.0
        %571 = vmatpush1.msra.mxu0 0.0
        %572 = vmatprep.subr.mxu0 0.0
        %573 = vmatpush1.msra.mxu0 0.0
        %574 = vmatprep.subr.mxu0 0.0
        %575 = vmatpush1.msra.mxu0 0.0
        %576 = vmatprep.subr.mxu0 0.0
        %577 = vmatpush1.msra.mxu0 0.0
        %578 = vmatprep.mubr.f32.mxu0 0.0
        %579 = vmatmul.mubr.f32.gmra.mrb[0].mxu0 %v512
        %v580 = vpop.f32.mrb[0].mxu0
        %v581 = vadd.f32 0.0, %v580
        %v582 = vpop.f32.mrb[0].mxu0
        %v583 = vadd.f32 0.0, %v582
        %584 = vdwg.mxu0
        %v585 = vld [vmem:[%s4] sm:$0x3]
        %v587 = vlaneseq
        %v588 = vshrl.u32 %v587, 7
        %v589 = vsub.s32 0, %v588
        %v590 = vrot.slane %v585, %v589
        %v591 = vlaneseq
        %v592 = vshrl.u32 %v591, 7
        %v593 = vsub.s32 1, %v592
        %v594 = vrot.slane %v585, %v593
        %v597 = vmul.f32 %v581, %v590
        %v598 = vmul.f32 %v583, %v594
        %v600 = vsel %vm510, %v418, 0
        %602 = vmatprep.subr.mxu0 %v495
        %603 = vmatpush1.msra.mxu0 %v494
        %604 = vmatprep.subr.mxu0 %v497
        %605 = vmatpush1.msra.mxu0 %v496
        %606 = vmatprep.subr.mxu0 %v499
        %607 = vmatpush1.msra.mxu0 %v498
        %608 = vmatprep.subr.mxu0 %v501
        %609 = vmatpush1.msra.mxu0 %v500
        %610 = vmatprep.subr.mxu0 %v503
        %611 = vmatpush1.msra.mxu0 %v502
        %612 = vmatprep.subr.mxu0 %v505
        %613 = vmatpush1.msra.mxu0 %v504
        %614 = vmatprep.subr.mxu0 %v507
        %615 = vmatpush1.msra.mxu0 %v506
        %616 = vmatprep.subr.mxu0 %v509
        %617 = vmatpush1.msra.mxu0 %v508
        %618 = vmatprep.subr.mxu0 0.0
        %619 = vmatpush1.msra.mxu0 0.0
        %620 = vmatprep.subr.mxu0 0.0
        %621 = vmatpush1.msra.mxu0 0.0
        %622 = vmatprep.subr.mxu0 0.0
        %623 = vmatpush1.msra.mxu0 0.0
        %624 = vmatprep.subr.mxu0 0.0
        %625 = vmatpush1.msra.mxu0 0.0
        %626 = vmatprep.subr.mxu0 0.0
        %627 = vmatpush1.msra.mxu0 0.0
        %628 = vmatprep.subr.mxu0 0.0
        %629 = vmatpush1.msra.mxu0 0.0
        %630 = vmatprep.subr.mxu0 0.0
        %631 = vmatpush1.msra.mxu0 0.0
        %632 = vmatprep.subr.mxu0 0.0
        %633 = vmatpush1.msra.mxu0 0.0
        %634 = vmatprep.subr.mxu0 0.0
        %635 = vmatpush1.msra.mxu0 0.0
        %636 = vmatprep.subr.mxu0 0.0
        %637 = vmatpush1.msra.mxu0 0.0
        %638 = vmatprep.subr.mxu0 0.0
        %639 = vmatpush1.msra.mxu0 0.0
        %640 = vmatprep.subr.mxu0 0.0
        %641 = vmatpush1.msra.mxu0 0.0
        %642 = vmatprep.subr.mxu0 0.0
        %643 = vmatpush1.msra.mxu0 0.0
        %644 = vmatprep.subr.mxu0 0.0
        %645 = vmatpush1.msra.mxu0 0.0
        %646 = vmatprep.subr.mxu0 0.0
        %647 = vmatpush1.msra.mxu0 0.0
        %648 = vmatprep.subr.mxu0 0.0
        %649 = vmatpush1.msra.mxu0 0.0
        %650 = vmatprep.subr.mxu0 0.0
        %651 = vmatpush1.msra.mxu0 0.0
        %652 = vmatprep.subr.mxu0 0.0
        %653 = vmatpush1.msra.mxu0 0.0
        %654 = vmatprep.subr.mxu0 0.0
        %655 = vmatpush1.msra.mxu0 0.0
        %656 = vmatprep.subr.mxu0 0.0
        %657 = vmatpush1.msra.mxu0 0.0
        %658 = vmatprep.subr.mxu0 0.0
        %659 = vmatpush1.msra.mxu0 0.0
        %660 = vmatprep.subr.mxu0 0.0
        %661 = vmatpush1.msra.mxu0 0.0
        %662 = vmatprep.subr.mxu0 0.0
        %663 = vmatpush1.msra.mxu0 0.0
        %664 = vmatprep.subr.mxu0 0.0
        %665 = vmatpush1.msra.mxu0 0.0
        %666 = vmatprep.mubr.f32.mxu0 0.0
        %667 = vmatmul.mubr.f32.gmra.mrb[0].mxu0 %v600
        %v668 = vpop.f32.mrb[0].mxu0
        %v669 = vadd.f32 %v597, %v668
        %v670 = vpop.f32.mrb[0].mxu0
        %v671 = vadd.f32 %v598, %v670
        %672 = vdwg.mxu0
        %v673 = vld [vmem:[%s5] sm:$0x3]
        %v675 = vlaneseq
        %v676 = vshrl.u32 %v675, 7
        %v677 = vsub.s32 0, %v676
        %v678 = vrot.slane %v673, %v677
        %v679 = vlaneseq
        %v680 = vshrl.u32 %v679, 7
        %v681 = vsub.s32 1, %v680
        %v682 = vrot.slane %v673, %v681
        %v685 = vmul.f32 %v669, %v678
        %v686 = vmul.f32 %v671, %v682
        %v687 = vld [vmem:[%s3] sm:$0xff]
        %v688 = vld [vmem:[%s3 + $0x8] sm:$0xff]
        %v689 = vld [vmem:[%s3 + $0x10] sm:$0xff]
        %v690 = vld [vmem:[%s3 + $0x18] sm:$0xff]
        %v691 = vld [vmem:[%s3 + $0x20] sm:$0xff]
        %v692 = vld [vmem:[%s3 + $0x28] sm:$0xff]
        %v693 = vld [vmem:[%s3 + $0x30] sm:$0xff]
        %v694 = vld [vmem:[%s3 + $0x38] sm:$0xff]
        %v695 = vld [vmem:[%s3 + $0x40] sm:$0xff]
        %v696 = vld [vmem:[%s3 + $0x48] sm:$0xff]
        %v697 = vld [vmem:[%s3 + $0x50] sm:$0xff]
        %v698 = vld [vmem:[%s3 + $0x58] sm:$0xff]
        %v699 = vld [vmem:[%s3 + $0x60] sm:$0xff]
        %v700 = vld [vmem:[%s3 + $0x68] sm:$0xff]
        %v701 = vld [vmem:[%s3 + $0x70] sm:$0xff]
        %v702 = vld [vmem:[%s3 + $0x78] sm:$0xff]
        %v703 = vld [vmem:[%s3 + $0x80] sm:$0xff]
        %v704 = vld [vmem:[%s3 + $0x88] sm:$0xff]
        %v705 = vld [vmem:[%s3 + $0x90] sm:$0xff]
        %v706 = vld [vmem:[%s3 + $0x98] sm:$0xff]
        %v707 = vld [vmem:[%s3 + $0xa0] sm:$0xff]
        %v708 = vld [vmem:[%s3 + $0xa8] sm:$0xff]
        %v709 = vld [vmem:[%s3 + $0xb0] sm:$0xff]
        %v710 = vld [vmem:[%s3 + $0xb8] sm:$0xff]
        %v711 = vld [vmem:[%s3 + $0xc0] sm:$0xff]
        %v712 = vld [vmem:[%s3 + $0xc8] sm:$0xff]
        %v713 = vld [vmem:[%s3 + $0xd0] sm:$0xff]
        %v714 = vld [vmem:[%s3 + $0xd8] sm:$0xff]
        %v715 = vld [vmem:[%s3 + $0xe0] sm:$0xff]
        %v716 = vld [vmem:[%s3 + $0xe8] sm:$0xff]
        %v717 = vld [vmem:[%s3 + $0xf0] sm:$0xff]
        %v718 = vld [vmem:[%s3 + $0xf8] sm:$0xff]
        %719 = vmatprep.subr.mxu0 0.0
        %720 = vmatpush1.msra.mxu0 %v687
        %721 = vmatprep.subr.mxu0 0.0
        %722 = vmatpush1.msra.mxu0 %v688
        %723 = vmatprep.subr.mxu0 0.0
        %724 = vmatpush1.msra.mxu0 %v689
        %725 = vmatprep.subr.mxu0 0.0
        %726 = vmatpush1.msra.mxu0 %v690
        %727 = vmatprep.subr.mxu0 0.0
        %728 = vmatpush1.msra.mxu0 %v691
        %729 = vmatprep.subr.mxu0 0.0
        %730 = vmatpush1.msra.mxu0 %v692
        %731 = vmatprep.subr.mxu0 0.0
        %732 = vmatpush1.msra.mxu0 %v693
        %733 = vmatprep.subr.mxu0 0.0
        %734 = vmatpush1.msra.mxu0 %v694
        %735 = vmatprep.subr.mxu0 0.0
        %736 = vmatpush1.msra.mxu0 %v695
        %737 = vmatprep.subr.mxu0 0.0
        %738 = vmatpush1.msra.mxu0 %v696
        %739 = vmatprep.subr.mxu0 0.0
        %740 = vmatpush1.msra.mxu0 %v697
        %741 = vmatprep.subr.mxu0 0.0
        %742 = vmatpush1.msra.mxu0 %v698
        %743 = vmatprep.subr.mxu0 0.0
        %744 = vmatpush1.msra.mxu0 %v699
        %745 = vmatprep.subr.mxu0 0.0
        %746 = vmatpush1.msra.mxu0 %v700
        %747 = vmatprep.subr.mxu0 0.0
        %748 = vmatpush1.msra.mxu0 %v701
        %749 = vmatprep.subr.mxu0 0.0
        %750 = vmatpush1.msra.mxu0 %v702
        %751 = vmatprep.subr.mxu0 0.0
        %752 = vmatpush1.msra.mxu0 %v703
        %753 = vmatprep.subr.mxu0 0.0
        %754 = vmatpush1.msra.mxu0 %v704
        %755 = vmatprep.subr.mxu0 0.0
        %756 = vmatpush1.msra.mxu0 %v705
        %757 = vmatprep.subr.mxu0 0.0
        %758 = vmatpush1.msra.mxu0 %v706
        %759 = vmatprep.subr.mxu0 0.0
        %760 = vmatpush1.msra.mxu0 %v707
        %761 = vmatprep.subr.mxu0 0.0
        %762 = vmatpush1.msra.mxu0 %v708
        %763 = vmatprep.subr.mxu0 0.0
        %764 = vmatpush1.msra.mxu0 %v709
        %765 = vmatprep.subr.mxu0 0.0
        %766 = vmatpush1.msra.mxu0 %v710
        %767 = vmatprep.subr.mxu0 0.0
        %768 = vmatpush1.msra.mxu0 %v711
        %769 = vmatprep.subr.mxu0 0.0
        %770 = vmatpush1.msra.mxu0 %v712
        %771 = vmatprep.subr.mxu0 0.0
        %772 = vmatpush1.msra.mxu0 %v713
        %773 = vmatprep.subr.mxu0 0.0
        %774 = vmatpush1.msra.mxu0 %v714
        %775 = vmatprep.subr.mxu0 0.0
        %776 = vmatpush1.msra.mxu0 %v715
        %777 = vmatprep.subr.mxu0 0.0
        %778 = vmatpush1.msra.mxu0 %v716
        %779 = vmatprep.subr.mxu0 0.0
        %780 = vmatpush1.msra.mxu0 %v717
        %781 = vmatprep.subr.mxu0 0.0
        %782 = vmatpush1.msra.mxu0 %v718
        %783 = vmatprep.mubr.f32.mxu0 %v686
        %784 = vmatmul.mubr.f32.gmra.mrb[0].mxu0 %v685
        %v785 = vpop.f32.mrb[0].mxu0
        %v786 = vadd.f32 0.0, %v785
        %v787 = vpop.f32.mrb[0].mxu0
        %788 = vdwg.mxu0
        %789 = vst.msk [vmem:[%s329] sm:$0xff] %vm510, %v786
        %v790 = vsub.f32 %v418, %v786
        %v791 = vmul.f32 %v685, %v685
        %v792 = vmul.f32 %v686, %v686
        %v793 = vadd.f32 %v791, %v792
        %794 = vadd.xlane.f32.xlu0 %v793
        %v795 = vpop.xlane.xlu0 %794
        %v796 = vrot.slane %v795, 4
        %v797 = vadd.f32 %v795, %v796
        %v798 = vrot.slane %v797, 2
        %v799 = vadd.f32 %v797, %v798
        %v800 = vrot.slane %v799, 1
        %v801 = vadd.f32 %v799, %v800
        %s802 = vtos %v801
        %v803 = vstv %s802
        %vm804 = vcmask 0
        %805 = vst.msk [vmem:[%s332] sm:$0x1] %vm804, %v803
        %v806 = vmul.f32 %v790, %v790
        %v807 = vsel %vm510, %v806, 0.0
        %808 = vadd.xlane.f32.xlu0 %v807
        %v809 = vpop.xlane.xlu0 %808
        %v810 = vrot.slane %v809, 4
        %v811 = vadd.f32 %v809, %v810
        %v812 = vrot.slane %v811, 2
        %v813 = vadd.f32 %v811, %v812
        %v814 = vrot.slane %v813, 1
        %v815 = vadd.f32 %v813, %v814
        %s816 = vtos %v815
        %v817 = vstv %s816
        %818 = vst.msk [vmem:[%s335] sm:$0x1] %vm804, %v817
        %p819 = scmp.lt.s32.totalorder %s21, 1
        %s820 = scalar_select %p819, %s21, 1
        %s821 = smul.addr %s820, 8
        %s822 = scalar_lea.vmem %s6, %s821
        %p823 = scmp.lt.s32.totalorder %s21, 1
        %s824 = scalar_select %p823, %s21, 1
        %s825 = scalar_lea.vmem %s7, %s824
        %p826 = scmp.lt.s32.totalorder %s21, 1
        %s827 = scalar_select %p826, %s21, 1
        %s828 = scalar_lea.vmem %s8, %s827
        // Predicated region
        $region49: #{equinorm_forward.1} parent=43 // pred_check
          %p829 = pneg %p170
        $region50: #{equinorm_forward.1} parent=43 // pred_check_branch
          %831 = sbr.rel (%p829) target = $region52
        $region51: #{equinorm_forward.1} parent=43 // pred_region
          _
        $region52: #{equinorm_forward.1} parent=43 // pred_fallthru
          _
        // Predicated region
        $region53: #{equinorm_forward.1} parent=43 // pred_check
          %p832 = pneg %p196
        $region54: #{equinorm_forward.1} parent=43 // pred_check_branch
          %834 = sbr.rel (%p832) target = $region56
        $region55: #{equinorm_forward.1} parent=43 // pred_region
          _
        $region56: #{equinorm_forward.1} parent=43 // pred_fallthru
          _
        // Predicated region
        $region57: #{equinorm_forward.1} parent=43 // pred_check
          %p835 = pneg %p222
        $region58: #{equinorm_forward.1} parent=43 // pred_check_branch
          %837 = sbr.rel (%p835) target = $region60
        $region59: #{equinorm_forward.1} parent=43 // pred_region
          _
        $region60: #{equinorm_forward.1} parent=43 // pred_fallthru
          _
      $region44: #{equinorm_forward.1} parent=5 // pred_fallthru
        _
      %p838 = scmp.le.s32.totalorder 2, %s16
      // Predicated region
      $region61: #{equinorm_forward.1} parent=5 // pred_check
        %p839 = pneg %p838
      $region62: #{equinorm_forward.1} parent=5 // pred_check_branch
        %841 = sbr.rel (%p839) target = $region64
      $region63: #{equinorm_forward.1} parent=5 // pred_region
        %s842 = ssub.s32 %s16, 2
        // Predicated region
        $region65: #{equinorm_forward.1} parent=63 // pred_check
          %p843 = pneg %p176
        $region66: #{equinorm_forward.1} parent=63 // pred_check_branch
          %845 = sbr.rel (%p843) target = $region68
        $region67: #{equinorm_forward.1} parent=63 // pred_region
          %p846 = scmp.lt.s32.totalorder %s22, 1
          %s847 = scalar_select %p846, %s22, 1
          %s848 = smul.addr %s847, 8
          %s849 = scalar_lea.vmem %s6, %s848
        $region68: #{equinorm_forward.1} parent=63 // pred_fallthru
          _
        // Predicated region
        $region69: #{equinorm_forward.1} parent=63 // pred_check
          %p850 = pneg %p202
        $region70: #{equinorm_forward.1} parent=63 // pred_check_branch
          %852 = sbr.rel (%p850) target = $region72
        $region71: #{equinorm_forward.1} parent=63 // pred_region
          %p853 = scmp.lt.s32.totalorder %s22, 1
          %s854 = scalar_select %p853, %s22, 1
          %s855 = scalar_lea.vmem %s7, %s854
        $region72: #{equinorm_forward.1} parent=63 // pred_fallthru
          _
        // Predicated region
        $region73: #{equinorm_forward.1} parent=63 // pred_check
          %p856 = pneg %p228
        $region74: #{equinorm_forward.1} parent=63 // pred_check_branch
          %858 = sbr.rel (%p856) target = $region76
        $region75: #{equinorm_forward.1} parent=63 // pred_region
          %p859 = scmp.lt.s32.totalorder %s22, 1
          %s860 = scalar_select %p859, %s22, 1
          %s861 = scalar_lea.vmem %s8, %s860
        $region76: #{equinorm_forward.1} parent=63 // pred_fallthru
          _
      $region64: #{equinorm_forward.1} parent=5 // pred_fallthru
        _
    $region6: #{equinorm_forward.1} parent=1 // loop_footer
      %s20 = sadd.s32 1, %s16
    $region7: #{equinorm_forward.1} parent=1 // loop_footer_branch
      %15 = sbr.rel target = $region3
    $region8: #{equinorm_forward.1} parent=1 // loop_exit
      _
    %862 = vsyncpa [#allocation3], 1
    %s863 = scalar_lea.sflag [#allocation3], 1
    %864 = vsyncpa %s863, 1

</llo_original>
